<compile_context>
chip_gen: v7x
topology: tpu7x:2x2x1
jax: 0.10.0
libtpu: 0.0.40
codegen_flags: <defaults>
</compile_context>

<pallas_src>
import jax
import jax.numpy as jnp
from jax.experimental import pallas as pl
from jax.experimental.pallas import tpu as pltpu

_LANE = 128
_SUBLANE = 8


def _round_up(x: int, m: int) -> int:
    return ((x + m - 1) // m) * m


def _critic_kernel(s_ref, a_ref,
                   w_vf_ref, b_vf_ref,
                   w_qf_ref, b_qf_ref,
                   w_sh_vf_ref, w_sh_qf_ref, b_sh_ref,
                   w_q_row_ref, b_q_ref,
                   out_ref):
    # State net: ReLU(states @ W_vf + b_vf)   (bf16 MXU inputs, f32 accumulate)
    latent_vf = jnp.dot(s_ref[...], w_vf_ref[...],
                        preferred_element_type=jnp.float32)
    latent_vf = jnp.maximum(latent_vf + b_vf_ref[...], 0.0)

    # Action net: ReLU(actions @ W_qf + b_qf)
    latent_qf = jnp.dot(a_ref[...], w_qf_ref[...],
                        preferred_element_type=jnp.float32)
    latent_qf = jnp.maximum(latent_qf + b_qf_ref[...], 0.0)

    # Shared net == ReLU(concat([latent_vf, latent_qf], -1) @ W_sh + b_sh)
    shared = (jnp.dot(latent_vf.astype(w_sh_vf_ref.dtype), w_sh_vf_ref[...],
                      preferred_element_type=jnp.float32)
              + jnp.dot(latent_qf.astype(w_sh_qf_ref.dtype), w_sh_qf_ref[...],
                        preferred_element_type=jnp.float32)
              + b_sh_ref[...])
    shared = jnp.maximum(shared, 0.0)

    # q_net: Linear(hidden, 1).  N=1 matmul replaced by VPU multiply + XLU lane
    # reduction.  The scalar-per-row result is broadcast across all 128 lanes
    # so the store is an unmasked, lane-dense vst; the wrapper slices column 0.
    q = jnp.sum(shared * w_q_row_ref[...], axis=-1, keepdims=True)   # (TB, 1)
    out_ref[...] = (q + b_q_ref[...]).astype(out_ref.dtype)          # (TB, 128)


def _pick_batch_tile(B: int, F_pad: int, A_pad: int) -> int:
    """Largest batch tile (multiple of 8, <=512) whose double-buffered bf16
    activation tiles + f32 output tiles stay under ~12 MiB of VMEM."""
    budget = 12 << 20
    # per-row bytes: 2 buffers each of states(bf16) + actions(bf16) + out(f32)
    per_row = 2 * (2 * F_pad + 2 * A_pad + 4 * _LANE)
    tb = max(_SUBLANE, (budget // max(per_row, 1)) // _SUBLANE * _SUBLANE)
    tb = min(512, tb, _round_up(B, _SUBLANE))
    return max(_SUBLANE, tb)


def critic_dualing_fore(obs, actions, params, *, compute_dtype=jnp.bfloat16):
    """obs: [B, C, H, W] float32, actions: [B, action_dim] float32 -> q: [B, 1]."""
    B = obs.shape[0]
    states = obs.reshape(B, -1)          # Flatten (row-major, matches torch.flatten)
    F = states.shape[1]
    A = actions.shape[1]
    Hn = params["w_vf"].shape[1]

    # Lane-dense padded sizes.
    F_pad = _round_up(F, _LANE)
    A_pad = _round_up(A, _LANE)
    H_pad = _round_up(Hn, _LANE)

    # Batch tile: amortizes per-step overhead, multiple of 8 sublanes; batch is
    # zero-padded up to a whole number of tiles (padded rows produce finite
    # garbage and are sliced away below).
    TB = _pick_batch_tile(B, F_pad, A_pad)
    B_pad = _round_up(B, TB)

    def pad2(x, r, c):
        return jnp.pad(x, ((0, r - x.shape[0]), (0, c - x.shape[1])))

    # Activations (bf16 halves DMA bytes; MXU accumulates in f32).
    s_p = pad2(states, B_pad, F_pad).astype(compute_dtype)
    a_p = pad2(actions, B_pad, A_pad).astype(compute_dtype)

    # Matmul weights in bf16; biases / q-head row in f32 (f32 VPU epilogue).
    w_vf = pad2(params["w_vf"], F_pad, H_pad).astype(compute_dtype)
    w_qf = pad2(params["w_qf"], A_pad, H_pad).astype(compute_dtype)
    w_sh_vf = pad2(params["w_sh_vf"], H_pad, H_pad).astype(compute_dtype)
    w_sh_qf = pad2(params["w_sh_qf"], H_pad, H_pad).astype(compute_dtype)
    b_vf = pad2(params["b_vf"], 1, H_pad).astype(jnp.float32)
    b_qf = pad2(params["b_qf"], 1, H_pad).astype(jnp.float32)
    b_sh = pad2(params["b_sh"], 1, H_pad).astype(jnp.float32)
    w_q_row = pad2(params["w_q"].T, 1, H_pad).astype(jnp.float32)     # (1, H_pad)
    b_q_row = jnp.broadcast_to(params["b_q"].astype(jnp.float32), (1, _LANE))

    args = (s_p, a_p,
            w_vf, b_vf,
            w_qf, b_qf,
            w_sh_vf, w_sh_qf, b_sh,
            w_q_row, b_q_row)

    grid = (B_pad // TB,)

    def resident(x):  # stays in VMEM across all grid steps (constant block index)
        return pl.BlockSpec(x.shape, lambda i: (0, 0))

    in_specs = [
        pl.BlockSpec((TB, F_pad), lambda i: (i, 0)),   # states tile
        pl.BlockSpec((TB, A_pad), lambda i: (i, 0)),   # actions tile
        resident(w_vf), resident(b_vf),
        resident(w_qf), resident(b_qf),
        resident(w_sh_vf), resident(w_sh_qf), resident(b_sh),
        resident(w_q_row), resident(b_q_row),
    ]
    out_specs = pl.BlockSpec((TB, _LANE), lambda i: (i, 0))

    flops = 2 * B_pad * (F_pad * H_pad + A_pad * H_pad + 2 * H_pad * H_pad + H_pad)
    bytes_accessed = (sum(int(x.size) * x.dtype.itemsize for x in args)
                      + B_pad * _LANE * 4)

    out = pl.pallas_call(
        _critic_kernel,
        out_shape=jax.ShapeDtypeStruct((B_pad, _LANE), jnp.float32),
        grid_spec=pltpu.PrefetchScalarGridSpec(
            num_scalar_prefetch=0,
            grid=grid,
            in_specs=in_specs,
            out_specs=out_specs,
        ),
        compiler_params=pltpu.CompilerParams(
            dimension_semantics=("parallel",)),
        cost_estimate=pl.CostEstimate(flops=flops, transcendentals=0,
                                      bytes_accessed=bytes_accessed),
    )(*args)

    return out[:B, :1]


def init_params(key, features_dim, action_dim, hidden):
    """Deterministic synthetic parameter init (stand-in for weight_init)."""
    ks = jax.random.split(key, 5)
    scale = 0.1
    return {
        # State net: Linear(features_dim, hidden)
        "w_vf": scale * jax.random.normal(ks[0], (features_dim, hidden), jnp.float32),
        "b_vf": jnp.zeros((1, hidden), jnp.float32),
        # Action net: Linear(action_dim, hidden)
        "w_qf": scale * jax.random.normal(ks[1], (action_dim, hidden), jnp.float32),
        "b_qf": jnp.zeros((1, hidden), jnp.float32),
        # Shared net: Linear(2*hidden, hidden), split into the two concat halves
        "w_sh_vf": scale * jax.random.normal(ks[2], (hidden, hidden), jnp.float32),
        "w_sh_qf": scale * jax.random.normal(ks[3], (hidden, hidden), jnp.float32),
        "b_sh": jnp.zeros((1, hidden), jnp.float32),
        # q_net: Linear(hidden, 1)
        "w_q": scale * jax.random.normal(ks[4], (hidden, 1), jnp.float32),
        "b_q": jnp.zeros((1, 1), jnp.float32),
    }


if __name__ == "__main__":
    key = jax.random.PRNGKey(0)
    k_obs, k_act, k_par = jax.random.split(key, 3)

    B, C, H, W = 2, 4, 4, 4          # obs NCHW
    action_dim = 8
    hidden = 32
    features_dim = C * H * W         # Flatten feature extractor

    obs = jax.random.normal(k_obs, (B, C, H, W), jnp.float32)
    actions = jax.random.normal(k_act, (B, action_dim), jnp.float32)
    params = init_params(k_par, features_dim, action_dim, hidden)

    q = critic_dualing_fore(obs, actions, params)
    jax.block_until_ready(q)
    assert q.shape == (B, 1)

    # Reference 1: pure-JAX mirror of the kernel's compute dtype (bf16 MXU
    # inputs, f32 accumulation / epilogue) — should match tightly.
    cd = jnp.bfloat16
    s = obs.reshape(B, -1)
    lat_vf = jax.nn.relu(jnp.dot(s.astype(cd), params["w_vf"].astype(cd),
                                 preferred_element_type=jnp.float32) + params["b_vf"])
    lat_qf = jax.nn.relu(jnp.dot(actions.astype(cd), params["w_qf"].astype(cd),
                                 preferred_element_type=jnp.float32) + params["b_qf"])
    shared = jax.nn.relu(
        jnp.dot(lat_vf.astype(cd), params["w_sh_vf"].astype(cd),
                preferred_element_type=jnp.float32)
        + jnp.dot(lat_qf.astype(cd), params["w_sh_qf"].astype(cd),
                  preferred_element_type=jnp.float32)
        + params["b_sh"])
    q_ref_bf16 = shared @ params["w_q"] + params["b_q"]
    assert jnp.allclose(q, q_ref_bf16, atol=1e-3, rtol=1e-3)

    # Reference 2: full-f32 semantics of the original module (only bf16 input
    # rounding differs, so a looser tolerance).
    lat_vf32 = jax.nn.relu(s @ params["w_vf"] + params["b_vf"])
    lat_qf32 = jax.nn.relu(actions @ params["w_qf"] + params["b_qf"])
    shared32 = jax.nn.relu(lat_vf32 @ params["w_sh_vf"]
                           + lat_qf32 @ params["w_sh_qf"] + params["b_sh"])
    q_ref32 = shared32 @ params["w_q"] + params["b_q"]
    assert jnp.allclose(q, q_ref32, atol=5e-2, rtol=5e-2)

    print("KERNEL_OK")
</pallas_src>

<mosaic_0001>
module attributes {stable_mosaic.version = 11 : i64} {
  func.func @_critic_kernel(%arg0: i32, %arg1: memref<8x128xbf16, #tpu.memory_space<vmem>>, %arg2: memref<8x128xbf16, #tpu.memory_space<vmem>>, %arg3: memref<128x128xbf16, #tpu.memory_space<vmem>>, %arg4: memref<1x128xf32, #tpu.memory_space<vmem>>, %arg5: memref<128x128xbf16, #tpu.memory_space<vmem>>, %arg6: memref<1x128xf32, #tpu.memory_space<vmem>>, %arg7: memref<128x128xbf16, #tpu.memory_space<vmem>>, %arg8: memref<128x128xbf16, #tpu.memory_space<vmem>>, %arg9: memref<1x128xf32, #tpu.memory_space<vmem>>, %arg10: memref<1x128xf32, #tpu.memory_space<vmem>>, %arg11: memref<1x128xf32, #tpu.memory_space<vmem>>, %arg12: memref<8x128xf32, #tpu.memory_space<vmem>>) attributes {dimension_semantics = [#tpu.dimension_semantics<parallel>], iteration_bounds = array<i64: 1>, scalar_prefetch = 0 : i64, scratch_operands = 0 : i64, tpu.core_type = #tpu.core_type<tc>, window_params = [{transform_indices = @transform_0, window_bounds = array<i64: 8, 128>}, {transform_indices = @transform_1, window_bounds = array<i64: 8, 128>}, {pipeline_mode = #tpu.pipeline_mode<synchronous>, transform_indices = @transform_2, window_bounds = array<i64: 128, 128>}, {pipeline_mode = #tpu.pipeline_mode<synchronous>, transform_indices = @transform_3, window_bounds = array<i64: 1, 128>}, {pipeline_mode = #tpu.pipeline_mode<synchronous>, transform_indices = @transform_4, window_bounds = array<i64: 128, 128>}, {pipeline_mode = #tpu.pipeline_mode<synchronous>, transform_indices = @transform_5, window_bounds = array<i64: 1, 128>}, {pipeline_mode = #tpu.pipeline_mode<synchronous>, transform_indices = @transform_6, window_bounds = array<i64: 128, 128>}, {pipeline_mode = #tpu.pipeline_mode<synchronous>, transform_indices = @transform_7, window_bounds = array<i64: 128, 128>}, {pipeline_mode = #tpu.pipeline_mode<synchronous>, transform_indices = @transform_8, window_bounds = array<i64: 1, 128>}, {pipeline_mode = #tpu.pipeline_mode<synchronous>, transform_indices = @transform_9, window_bounds = array<i64: 1, 128>}, {pipeline_mode = #tpu.pipeline_mode<synchronous>, transform_indices = @transform_10, window_bounds = array<i64: 1, 128>}, {transform_indices = @transform_11, window_bounds = array<i64: 8, 128>}]} {
    %c0 = arith.constant 0 : index
    %c0_0 = arith.constant 0 : index
    %0 = vector.load %arg1[%c0, %c0_0] : memref<8x128xbf16, #tpu.memory_space<vmem>>, vector<8x128xbf16>
    %c0_1 = arith.constant 0 : index
    %c0_2 = arith.constant 0 : index
    %1 = vector.load %arg3[%c0_1, %c0_2] : memref<128x128xbf16, #tpu.memory_space<vmem>>, vector<128x128xbf16>
    %cst = arith.constant dense<0.000000e+00> : vector<8x128xf32>
    %2 = tpu.matmul %0, %1, %cst {dimension_numbers = #tpu.dot_dimension_numbers<[1], [0], [0], [1], [0, 0, 1, 1], [], []>} : vector<8x128xbf16>, vector<128x128xbf16>, vector<8x128xf32> -> vector<8x128xf32>
    %c0_3 = arith.constant 0 : index
    %c0_4 = arith.constant 0 : index
    %3 = vector.load %arg4[%c0_3, %c0_4] : memref<1x128xf32, #tpu.memory_space<vmem>>, vector<1x128xf32>
    %4 = vector.broadcast %3 : vector<1x128xf32> to vector<8x128xf32>
    %5 = arith.addf %2, %4 : vector<8x128xf32>
    %cst_5 = arith.constant 0.000000e+00 : f32
    %6 = vector.broadcast %cst_5 : f32 to vector<8x128xf32>
    %7 = arith.maximumf %5, %6 : vector<8x128xf32>
    %c0_6 = arith.constant 0 : index
    %c0_7 = arith.constant 0 : index
    %8 = vector.load %arg2[%c0_6, %c0_7] : memref<8x128xbf16, #tpu.memory_space<vmem>>, vector<8x128xbf16>
    %c0_8 = arith.constant 0 : index
    %c0_9 = arith.constant 0 : index
    %9 = vector.load %arg5[%c0_8, %c0_9] : memref<128x128xbf16, #tpu.memory_space<vmem>>, vector<128x128xbf16>
    %cst_10 = arith.constant dense<0.000000e+00> : vector<8x128xf32>
    %10 = tpu.matmul %8, %9, %cst_10 {dimension_numbers = #tpu.dot_dimension_numbers<[1], [0], [0], [1], [0, 0, 1, 1], [], []>} : vector<8x128xbf16>, vector<128x128xbf16>, vector<8x128xf32> -> vector<8x128xf32>
    %c0_11 = arith.constant 0 : index
    %c0_12 = arith.constant 0 : index
    %11 = vector.load %arg6[%c0_11, %c0_12] : memref<1x128xf32, #tpu.memory_space<vmem>>, vector<1x128xf32>
    %12 = vector.broadcast %11 : vector<1x128xf32> to vector<8x128xf32>
    %13 = arith.addf %10, %12 : vector<8x128xf32>
    %cst_13 = arith.constant 0.000000e+00 : f32
    %14 = vector.broadcast %cst_13 : f32 to vector<8x128xf32>
    %15 = arith.maximumf %13, %14 : vector<8x128xf32>
    %16 = arith.truncf %7 : vector<8x128xf32> to vector<8x128xbf16>
    %c0_14 = arith.constant 0 : index
    %c0_15 = arith.constant 0 : index
    %17 = vector.load %arg7[%c0_14, %c0_15] : memref<128x128xbf16, #tpu.memory_space<vmem>>, vector<128x128xbf16>
    %cst_16 = arith.constant dense<0.000000e+00> : vector<8x128xf32>
    %18 = tpu.matmul %16, %17, %cst_16 {dimension_numbers = #tpu.dot_dimension_numbers<[1], [0], [0], [1], [0, 0, 1, 1], [], []>} : vector<8x128xbf16>, vector<128x128xbf16>, vector<8x128xf32> -> vector<8x128xf32>
    %19 = arith.truncf %15 : vector<8x128xf32> to vector<8x128xbf16>
    %c0_17 = arith.constant 0 : index
    %c0_18 = arith.constant 0 : index
    %20 = vector.load %arg8[%c0_17, %c0_18] : memref<128x128xbf16, #tpu.memory_space<vmem>>, vector<128x128xbf16>
    %cst_19 = arith.constant dense<0.000000e+00> : vector<8x128xf32>
    %21 = tpu.matmul %19, %20, %cst_19 {dimension_numbers = #tpu.dot_dimension_numbers<[1], [0], [0], [1], [0, 0, 1, 1], [], []>} : vector<8x128xbf16>, vector<128x128xbf16>, vector<8x128xf32> -> vector<8x128xf32>
    %22 = arith.addf %18, %21 : vector<8x128xf32>
    %c0_20 = arith.constant 0 : index
    %c0_21 = arith.constant 0 : index
    %23 = vector.load %arg9[%c0_20, %c0_21] : memref<1x128xf32, #tpu.memory_space<vmem>>, vector<1x128xf32>
    %24 = vector.broadcast %23 : vector<1x128xf32> to vector<8x128xf32>
    %25 = arith.addf %22, %24 : vector<8x128xf32>
    %cst_22 = arith.constant 0.000000e+00 : f32
    %26 = vector.broadcast %cst_22 : f32 to vector<8x128xf32>
    %27 = arith.maximumf %25, %26 : vector<8x128xf32>
    %c0_23 = arith.constant 0 : index
    %c0_24 = arith.constant 0 : index
    %28 = vector.load %arg10[%c0_23, %c0_24] : memref<1x128xf32, #tpu.memory_space<vmem>>, vector<1x128xf32>
    %29 = vector.broadcast %28 : vector<1x128xf32> to vector<8x128xf32>
    %30 = arith.mulf %27, %29 : vector<8x128xf32>
    %cst_25 = arith.constant dense<0.000000e+00> : vector<8xf32>
    %31 = vector.multi_reduction <add>, %30, %cst_25 [1] : vector<8x128xf32> to vector<8xf32>
    %32 = vector.shape_cast %31 : vector<8xf32> to vector<8x1xf32>
    %c0_26 = arith.constant 0 : index
    %c0_27 = arith.constant 0 : index
    %33 = vector.load %arg11[%c0_26, %c0_27] : memref<1x128xf32, #tpu.memory_space<vmem>>, vector<1x128xf32>
    %34 = vector.broadcast %32 : vector<8x1xf32> to vector<8x128xf32>
    %35 = vector.broadcast %33 : vector<1x128xf32> to vector<8x128xf32>
    %36 = arith.addf %34, %35 : vector<8x128xf32>
    %c0_28 = arith.constant 0 : index
    %c0_29 = arith.constant 0 : index
    %37 = vector.load %arg12[%c0_28, %c0_29] : memref<8x128xf32, #tpu.memory_space<vmem>>, vector<8x128xf32>
    tpu.vector_store %arg12[%c0_28, %c0_29], %36 {strides = array<i32>} : memref<8x128xf32, #tpu.memory_space<vmem>>, vector<8x128xf32>,
    return
  }
  func.func @transform_0(%arg0: i32) -> (i32, i32) {
    %c0_i32 = arith.constant 0 : i32
    %c0_i32_0 = arith.constant 0 : i32
    return %arg0, %c0_i32 : i32, i32
  }
  func.func @transform_1(%arg0: i32) -> (i32, i32) {
    %c0_i32 = arith.constant 0 : i32
    %c0_i32_0 = arith.constant 0 : i32
    return %arg0, %c0_i32 : i32, i32
  }
  func.func @transform_2(%arg0: i32) -> (i32, i32) {
    %c0_i32 = arith.constant 0 : i32
    %c0_i32_0 = arith.constant 0 : i32
    %c0_i32_1 = arith.constant 0 : i32
    return %c0_i32, %c0_i32_0 : i32, i32
  }
  func.func @transform_3(%arg0: i32) -> (i32, i32) {
    %c0_i32 = arith.constant 0 : i32
    %c0_i32_0 = arith.constant 0 : i32
    %c0_i32_1 = arith.constant 0 : i32
    return %c0_i32, %c0_i32_0 : i32, i32
  }
  func.func @transform_4(%arg0: i32) -> (i32, i32) {
    %c0_i32 = arith.constant 0 : i32
    %c0_i32_0 = arith.constant 0 : i32
    %c0_i32_1 = arith.constant 0 : i32
    return %c0_i32, %c0_i32_0 : i32, i32
  }
  func.func @transform_5(%arg0: i32) -> (i32, i32) {
    %c0_i32 = arith.constant 0 : i32
    %c0_i32_0 = arith.constant 0 : i32
    %c0_i32_1 = arith.constant 0 : i32
    return %c0_i32, %c0_i32_0 : i32, i32
  }
  func.func @transform_6(%arg0: i32) -> (i32, i32) {
    %c0_i32 = arith.constant 0 : i32
    %c0_i32_0 = arith.constant 0 : i32
    %c0_i32_1 = arith.constant 0 : i32
    return %c0_i32, %c0_i32_0 : i32, i32
  }
  func.func @transform_7(%arg0: i32) -> (i32, i32) {
    %c0_i32 = arith.constant 0 : i32
    %c0_i32_0 = arith.constant 0 : i32
    %c0_i32_1 = arith.constant 0 : i32
    return %c0_i32, %c0_i32_0 : i32, i32
  }
  func.func @transform_8(%arg0: i32) -> (i32, i32) {
    %c0_i32 = arith.constant 0 : i32
    %c0_i32_0 = arith.constant 0 : i32
    %c0_i32_1 = arith.constant 0 : i32
    return %c0_i32, %c0_i32_0 : i32, i32
  }
  func.func @transform_9(%arg0: i32) -> (i32, i32) {
    %c0_i32 = arith.constant 0 : i32
    %c0_i32_0 = arith.constant 0 : i32
    %c0_i32_1 = arith.constant 0 : i32
    return %c0_i32, %c0_i32_0 : i32, i32
  }
  func.func @transform_10(%arg0: i32) -> (i32, i32) {
    %c0_i32 = arith.constant 0 : i32
    %c0_i32_0 = arith.constant 0 : i32
    %c0_i32_1 = arith.constant 0 : i32
    return %c0_i32, %c0_i32_0 : i32, i32
  }
  func.func @transform_11(%arg0: i32) -> (i32, i32) {
    %c0_i32 = arith.constant 0 : i32
    %c0_i32_0 = arith.constant 0 : i32
    return %arg0, %c0_i32 : i32, i32
  }
}

</mosaic_0001>

<llo_original>
// kernel: tpu_custom_call.1
$region0: #{tpu_custom_call.1}
  #allocation0 [shape = 'u32[]', space=smem, size = 0x4, offset = 0x4, fixed_abs, tag = 'smem constant byte address 0x4 - core index']
  #allocation1 [shape = 'u32[144,128]{1,0:T(1,128)}', space=vmem, size = 0x12000, scoped, tag = 'internal scratch']
  %s0 = inlined_call_operand.hbm [shape: bf16[8,128], index: 0, kind: input, shape index: {}]
  %s1 = inlined_call_operand.hbm [shape: bf16[8,128], index: 1, kind: input, shape index: {}]
  %s2 = inlined_call_operand.hbm [shape: bf16[128,128], index: 2, kind: input, shape index: {}]
  %s3 = inlined_call_operand.vmem [shape: f32[1,128], index: 3, kind: input, shape index: {}]
  %s4 = inlined_call_operand.hbm [shape: bf16[128,128], index: 4, kind: input, shape index: {}]
  %s5 = inlined_call_operand.vmem [shape: f32[1,128], index: 5, kind: input, shape index: {}]
  %s6 = inlined_call_operand.hbm [shape: bf16[128,128], index: 6, kind: input, shape index: {}]
  %s7 = inlined_call_operand.hbm [shape: bf16[128,128], index: 7, kind: input, shape index: {}]
  %s8 = inlined_call_operand.vmem [shape: f32[1,128], index: 8, kind: input, shape index: {}]
  %s9 = inlined_call_operand.vmem [shape: f32[1,128], index: 9, kind: input, shape index: {}]
  %s10 = inlined_call_operand.vmem [shape: f32[1,128], index: 10, kind: input, shape index: {}]
  %s11 = inlined_call_operand.hbm [shape: f32[8,128], index: 11, kind: output, shape index: {}]
  %s12 = sld [smem:[#allocation0]]
  $region78: #{tpu_custom_call.1} parent=0
    _
  %s14 = ssub.s32 1, %s12
  %s15 = scalar_select 0, %s14, %s12
  $region1: #{tpu_custom_call.1} parent=0
    #allocation2 [shape = 'u8[2048]{0}', space=vmem, size = 0x800, scoped, tag = 'input window, operand 0, single buffered']
    #allocation3 [shape = 's32[1]{0}', space=sflag, size = 0x4, scoped, tag = 'scoped memory for tpu_custom_call.1']
    #allocation4 [shape = 's32[1]{0}', space=sflag, size = 0x4, scoped, tag = 'scoped memory for tpu_custom_call.1']
    #allocation5 [shape = 'u8[2048]{0}', space=vmem, size = 0x800, scoped, tag = 'input window, operand 1, single buffered']
    #allocation6 [shape = 's32[1]{0}', space=sflag, size = 0x4, scoped, tag = 'scoped memory for tpu_custom_call.1']
    #allocation7 [shape = 'u8[32768]{0}', space=vmem, size = 0x8000, scoped, tag = 'input window, operand 2, single buffered']
    #allocation8 [shape = 'u8[32768]{0}', space=vmem, size = 0x8000, scoped, tag = 'input window, operand 4, single buffered']
    #allocation9 [shape = 's32[1]{0}', space=sflag, size = 0x4, scoped, tag = 'scoped memory for tpu_custom_call.1']
    #allocation10 [shape = 'u8[32768]{0}', space=vmem, size = 0x8000, scoped, tag = 'input window, operand 6, single buffered']
    #allocation11 [shape = 'u8[32768]{0}', space=vmem, size = 0x8000, scoped, tag = 'input window, operand 7, single buffered']
    #allocation12 [shape = 's32[1]{0}', space=sflag, size = 0x4, scoped, tag = 'scoped memory for tpu_custom_call.1']
    #allocation13 [shape = 'u8[4096]{0}', space=vmem, size = 0x1000, scoped, tag = 'output window, operand 0, single buffered']
    %16 = vsyncpa [#allocation3], 0
    %17 = vsyncpa [#allocation6], 0
    %18 = vsyncpa [#allocation9], 0
    %19 = vsyncpa [#allocation12], 0
    %20 = vsyncpa [#allocation4], 0
    // Predicated region
    $region2: #{tpu_custom_call.1} parent=1 // pred_check
      _
    $region3: #{tpu_custom_call.1} parent=1 // pred_check_branch
      %22 = sbr.rel (0) target = $region5
    $region4: #{tpu_custom_call.1} parent=1 // pred_region
      %s24 = ssub.s32 64, 64
      %25 = vsyncadd [#allocation3], %s24
      %s27 = sshll.u32 [#allocation2], 4
      %s28 = int_to_ptr.vmem [resolvable:$true] %s27
      %30 = dma.hbm_to_vmem [thread:$0]  %s0, 64, %s28, [#allocation3]
    $region5: #{tpu_custom_call.1} parent=1 // pred_fallthru
      _
    // Predicated region
    $region6: #{tpu_custom_call.1} parent=1 // pred_check
      _
    $region7: #{tpu_custom_call.1} parent=1 // pred_check_branch
      %32 = sbr.rel (0) target = $region9
    $region8: #{tpu_custom_call.1} parent=1 // pred_region
      %s34 = ssub.s32 64, 64
      %35 = vsyncadd [#allocation6], %s34
      %s37 = sshll.u32 [#allocation5], 4
      %s38 = int_to_ptr.vmem [resolvable:$true] %s37
      %40 = dma.hbm_to_vmem [thread:$0]  %s1, 64, %s38, [#allocation6]
    $region9: #{tpu_custom_call.1} parent=1 // pred_fallthru
      _
    // Predicated region
    $region10: #{tpu_custom_call.1} parent=1 // pred_check
      _
    $region11: #{tpu_custom_call.1} parent=1 // pred_check_branch
      %42 = sbr.rel (0) target = $region13
    $region12: #{tpu_custom_call.1} parent=1 // pred_region
      %s44 = ssub.s32 1024, 1024
      %45 = vsyncadd [#allocation6], %s44
      %s46 = sshll.u32 [#allocation7], 4
      %s47 = int_to_ptr.vmem [resolvable:$true] %s46
      %52 = dma.hbm_to_vmem [thread:$0]  %s2, 1024, %s47, [#allocation6], 64, 64, 4
    $region13: #{tpu_custom_call.1} parent=1 // pred_fallthru
      _
    // Predicated region
    $region14: #{tpu_custom_call.1} parent=1 // pred_check
      _
    $region15: #{tpu_custom_call.1} parent=1 // pred_check_branch
      %54 = sbr.rel (0) target = $region17
    $region16: #{tpu_custom_call.1} parent=1 // pred_region
      _
    $region17: #{tpu_custom_call.1} parent=1 // pred_fallthru
      _
    // Predicated region
    $region18: #{tpu_custom_call.1} parent=1 // pred_check
      _
    $region19: #{tpu_custom_call.1} parent=1 // pred_check_branch
      %56 = sbr.rel (0) target = $region21
    $region20: #{tpu_custom_call.1} parent=1 // pred_region
      %s58 = ssub.s32 1024, 1024
      %59 = vsyncadd [#allocation9], %s58
      %s60 = sshll.u32 [#allocation8], 4
      %s61 = int_to_ptr.vmem [resolvable:$true] %s60
      %66 = dma.hbm_to_vmem [thread:$0]  %s4, 1024, %s61, [#allocation9], 64, 64, 4
    $region21: #{tpu_custom_call.1} parent=1 // pred_fallthru
      _
    // Predicated region
    $region22: #{tpu_custom_call.1} parent=1 // pred_check
      _
    $region23: #{tpu_custom_call.1} parent=1 // pred_check_branch
      %68 = sbr.rel (0) target = $region25
    $region24: #{tpu_custom_call.1} parent=1 // pred_region
      _
    $region25: #{tpu_custom_call.1} parent=1 // pred_fallthru
      _
    // Predicated region
    $region26: #{tpu_custom_call.1} parent=1 // pred_check
      _
    $region27: #{tpu_custom_call.1} parent=1 // pred_check_branch
      %70 = sbr.rel (0) target = $region29
    $region28: #{tpu_custom_call.1} parent=1 // pred_region
      %s72 = ssub.s32 1024, 1024
      %73 = vsyncadd [#allocation9], %s72
      %s74 = sshll.u32 [#allocation10], 4
      %s75 = int_to_ptr.vmem [resolvable:$true] %s74
      %80 = dma.hbm_to_vmem [thread:$0]  %s6, 1024, %s75, [#allocation9], 64, 64, 4
    $region29: #{tpu_custom_call.1} parent=1 // pred_fallthru
      _
    // Predicated region
    $region30: #{tpu_custom_call.1} parent=1 // pred_check
      _
    $region31: #{tpu_custom_call.1} parent=1 // pred_check_branch
      %82 = sbr.rel (0) target = $region33
    $region32: #{tpu_custom_call.1} parent=1 // pred_region
      %s84 = ssub.s32 1024, 1024
      %85 = vsyncadd [#allocation12], %s84
      %s86 = sshll.u32 [#allocation11], 4
      %s87 = int_to_ptr.vmem [resolvable:$true] %s86
      %92 = dma.hbm_to_vmem [thread:$0]  %s7, 1024, %s87, [#allocation12], 64, 64, 4
    $region33: #{tpu_custom_call.1} parent=1 // pred_fallthru
      _
    // Predicated region
    $region34: #{tpu_custom_call.1} parent=1 // pred_check
      _
    $region35: #{tpu_custom_call.1} parent=1 // pred_check_branch
      %94 = sbr.rel (0) target = $region37
    $region36: #{tpu_custom_call.1} parent=1 // pred_region
      _
    $region37: #{tpu_custom_call.1} parent=1 // pred_fallthru
      _
    // Predicated region
    $region38: #{tpu_custom_call.1} parent=1 // pred_check
      _
    $region39: #{tpu_custom_call.1} parent=1 // pred_check_branch
      %96 = sbr.rel (0) target = $region41
    $region40: #{tpu_custom_call.1} parent=1 // pred_region
      _
    $region41: #{tpu_custom_call.1} parent=1 // pred_fallthru
      _
    // Predicated region
    $region42: #{tpu_custom_call.1} parent=1 // pred_check
      _
    $region43: #{tpu_custom_call.1} parent=1 // pred_check_branch
      %98 = sbr.rel (0) target = $region45
    $region44: #{tpu_custom_call.1} parent=1 // pred_region
      _
    $region45: #{tpu_custom_call.1} parent=1 // pred_fallthru
      _
    // Predicated region
    $region46: #{tpu_custom_call.1} parent=1 // pred_check
      _
    $region47: #{tpu_custom_call.1} parent=1 // pred_check_branch
      %100 = sbr.rel (0) target = $region49
    $region48: #{tpu_custom_call.1} parent=1 // pred_region
      %101 = dma.done [#allocation3], 64
    $region49: #{tpu_custom_call.1} parent=1 // pred_fallthru
      _
    // Predicated region
    $region50: #{tpu_custom_call.1} parent=1 // pred_check
      _
    $region51: #{tpu_custom_call.1} parent=1 // pred_check_branch
      %103 = sbr.rel (0) target = $region53
    $region52: #{tpu_custom_call.1} parent=1 // pred_region
      %104 = dma.done [#allocation6], 64
    $region53: #{tpu_custom_call.1} parent=1 // pred_fallthru
      _
    // Predicated region
    $region54: #{tpu_custom_call.1} parent=1 // pred_check
      _
    $region55: #{tpu_custom_call.1} parent=1 // pred_check_branch
      %106 = sbr.rel (0) target = $region57
    $region56: #{tpu_custom_call.1} parent=1 // pred_region
      %107 = dma.done [#allocation6], 1024
    $region57: #{tpu_custom_call.1} parent=1 // pred_fallthru
      _
    // Predicated region
    $region58: #{tpu_custom_call.1} parent=1 // pred_check
      _
    $region59: #{tpu_custom_call.1} parent=1 // pred_check_branch
      %109 = sbr.rel (0) target = $region61
    $region60: #{tpu_custom_call.1} parent=1 // pred_region
      %110 = dma.done [#allocation9], 1024
    $region61: #{tpu_custom_call.1} parent=1 // pred_fallthru
      _
    // Predicated region
    $region62: #{tpu_custom_call.1} parent=1 // pred_check
      _
    $region63: #{tpu_custom_call.1} parent=1 // pred_check_branch
      %112 = sbr.rel (0) target = $region65
    $region64: #{tpu_custom_call.1} parent=1 // pred_region
      %113 = dma.done [#allocation9], 1024
    $region65: #{tpu_custom_call.1} parent=1 // pred_fallthru
      _
    // Predicated region
    $region66: #{tpu_custom_call.1} parent=1 // pred_check
      _
    $region67: #{tpu_custom_call.1} parent=1 // pred_check_branch
      %115 = sbr.rel (0) target = $region69
    $region68: #{tpu_custom_call.1} parent=1 // pred_region
      %116 = dma.done [#allocation12], 1024
    $region69: #{tpu_custom_call.1} parent=1 // pred_fallthru
      _
    %v118 = vld [vmem:[#allocation2] sm:$0xf]
    %v119 = vld [vmem:[#allocation7] sm:$0xf]
    %v120 = vld [vmem:[#allocation7 + $0x4] sm:$0xf]
    %v121 = vld [vmem:[#allocation7 + $0x8] sm:$0xf]
    %v122 = vld [vmem:[#allocation7 + $0xc] sm:$0xf]
    %v123 = vld [vmem:[#allocation7 + $0x10] sm:$0xf]
    %v124 = vld [vmem:[#allocation7 + $0x14] sm:$0xf]
    %v125 = vld [vmem:[#allocation7 + $0x18] sm:$0xf]
    %v126 = vld [vmem:[#allocation7 + $0x1c] sm:$0xf]
    %v127 = vld [vmem:[#allocation7 + $0x20] sm:$0xf]
    %v128 = vld [vmem:[#allocation7 + $0x24] sm:$0xf]
    %v129 = vld [vmem:[#allocation7 + $0x28] sm:$0xf]
    %v130 = vld [vmem:[#allocation7 + $0x2c] sm:$0xf]
    %v131 = vld [vmem:[#allocation7 + $0x30] sm:$0xf]
    %v132 = vld [vmem:[#allocation7 + $0x34] sm:$0xf]
    %v133 = vld [vmem:[#allocation7 + $0x38] sm:$0xf]
    %v134 = vld [vmem:[#allocation7 + $0x3c] sm:$0xf]
    %v135 = vld [vmem:[%s3] sm:$0x1]
    %v137 = vlaneseq
    %v138 = vshrl.u32 %v137, 7
    %v139 = vsub.s32 0, %v138
    %v140 = vrot.slane %v135, %v139
    %v158 = vunpack.c.l.b16 %v119
    %v159 = vunpack.c.l.b16 %v120
    %v160 = vunpack.c.l.b16 %v121
    %v161 = vunpack.c.l.b16 %v122
    %v162 = vunpack.c.l.b16 %v123
    %v163 = vunpack.c.l.b16 %v124
    %v164 = vunpack.c.l.b16 %v125
    %v165 = vunpack.c.l.b16 %v126
    %v166 = vunpack.c.l.b16 %v127
    %v167 = vunpack.c.l.b16 %v128
    %v168 = vunpack.c.l.b16 %v129
    %v169 = vunpack.c.l.b16 %v130
    %v170 = vunpack.c.l.b16 %v131
    %v171 = vunpack.c.l.b16 %v132
    %v172 = vunpack.c.l.b16 %v133
    %v173 = vunpack.c.l.b16 %v134
    %v174 = vpack.c.b16 %v159, %v158
    %v175 = vpack.c.b16 %v161, %v160
    %v176 = vpack.c.b16 %v163, %v162
    %v177 = vpack.c.b16 %v165, %v164
    %v178 = vpack.c.b16 %v167, %v166
    %v179 = vpack.c.b16 %v169, %v168
    %v180 = vpack.c.b16 %v171, %v170
    %v181 = vpack.c.b16 %v173, %v172
    %190 = vmatprep.subr.bf16.mxu0 0
    %191 = vmatpush1.bf16.msra.mxu0 %v174
    %192 = vmatprep.subr.bf16.mxu0 0
    %193 = vmatpush1.bf16.msra.mxu0 %v175
    %194 = vmatprep.subr.bf16.mxu0 0
    %195 = vmatpush1.bf16.msra.mxu0 %v176
    %196 = vmatprep.subr.bf16.mxu0 0
    %197 = vmatpush1.bf16.msra.mxu0 %v177
    %198 = vmatprep.subr.bf16.mxu0 0
    %199 = vmatpush1.bf16.msra.mxu0 %v178
    %200 = vmatprep.subr.bf16.mxu0 0
    %201 = vmatpush1.bf16.msra.mxu0 %v179
    %202 = vmatprep.subr.bf16.mxu0 0
    %203 = vmatpush1.bf16.msra.mxu0 %v180
    %204 = vmatprep.subr.bf16.mxu0 0
    %205 = vmatpush1.bf16.msra.mxu0 %v181
    %206 = vmatprep.subr.bf16.mxu0 0
    %207 = vmatpush1.bf16.msra.mxu0 0
    %208 = vmatprep.subr.bf16.mxu0 0
    %209 = vmatpush1.bf16.msra.mxu0 0
    %210 = vmatprep.subr.bf16.mxu0 0
    %211 = vmatpush1.bf16.msra.mxu0 0
    %212 = vmatprep.subr.bf16.mxu0 0
    %213 = vmatpush1.bf16.msra.mxu0 0
    %214 = vmatprep.subr.bf16.mxu0 0
    %215 = vmatpush1.bf16.msra.mxu0 0
    %216 = vmatprep.subr.bf16.mxu0 0
    %217 = vmatpush1.bf16.msra.mxu0 0
    %218 = vmatprep.subr.bf16.mxu0 0
    %219 = vmatpush1.bf16.msra.mxu0 0
    %220 = vmatprep.subr.bf16.mxu0 0
    %221 = vmatpush1.bf16.msra.mxu0 0
    %222 = vmatprep.mubr.bf16.mxu0 0
    %223 = vmatmul.mubr.bf16.gmra.mrb[0].mxu0 %v118
    %v224 = vpop.f32.mrb[0].mxu0
    %v225 = vadd.f32 %v140, %v224
    %v226 = vpop.f32.mrb[0].mxu0
    %v227 = vpop.f32.mrb[0].mxu0
    %v228 = vpop.f32.mrb[0].mxu0
    %229 = vdwg.mxu0
    %v230 = vmax.f32 %v225, 0.0
    %v231 = vld [vmem:[#allocation5] sm:$0xf]
    %v232 = vld [vmem:[#allocation8] sm:$0xf]
    %v233 = vld [vmem:[#allocation8 + $0x4] sm:$0xf]
    %v234 = vld [vmem:[#allocation8 + $0x8] sm:$0xf]
    %v235 = vld [vmem:[#allocation8 + $0xc] sm:$0xf]
    %v236 = vld [vmem:[#allocation8 + $0x10] sm:$0xf]
    %v237 = vld [vmem:[#allocation8 + $0x14] sm:$0xf]
    %v238 = vld [vmem:[#allocation8 + $0x18] sm:$0xf]
    %v239 = vld [vmem:[#allocation8 + $0x1c] sm:$0xf]
    %v240 = vld [vmem:[#allocation8 + $0x20] sm:$0xf]
    %v241 = vld [vmem:[#allocation8 + $0x24] sm:$0xf]
    %v242 = vld [vmem:[#allocation8 + $0x28] sm:$0xf]
    %v243 = vld [vmem:[#allocation8 + $0x2c] sm:$0xf]
    %v244 = vld [vmem:[#allocation8 + $0x30] sm:$0xf]
    %v245 = vld [vmem:[#allocation8 + $0x34] sm:$0xf]
    %v246 = vld [vmem:[#allocation8 + $0x38] sm:$0xf]
    %v247 = vld [vmem:[#allocation8 + $0x3c] sm:$0xf]
    %v248 = vld [vmem:[%s5] sm:$0x1]
    %v250 = vlaneseq
    %v251 = vshrl.u32 %v250, 7
    %v252 = vsub.s32 0, %v251
    %v253 = vrot.slane %v248, %v252
    %v271 = vunpack.c.l.b16 %v232
    %v272 = vunpack.c.l.b16 %v233
    %v273 = vunpack.c.l.b16 %v234
    %v274 = vunpack.c.l.b16 %v235
    %v275 = vunpack.c.l.b16 %v236
    %v276 = vunpack.c.l.b16 %v237
    %v277 = vunpack.c.l.b16 %v238
    %v278 = vunpack.c.l.b16 %v239
    %v279 = vunpack.c.l.b16 %v240
    %v280 = vunpack.c.l.b16 %v241
    %v281 = vunpack.c.l.b16 %v242
    %v282 = vunpack.c.l.b16 %v243
    %v283 = vunpack.c.l.b16 %v244
    %v284 = vunpack.c.l.b16 %v245
    %v285 = vunpack.c.l.b16 %v246
    %v286 = vunpack.c.l.b16 %v247
    %v287 = vpack.c.b16 %v272, %v271
    %v288 = vpack.c.b16 %v274, %v273
    %v289 = vpack.c.b16 %v276, %v275
    %v290 = vpack.c.b16 %v278, %v277
    %v291 = vpack.c.b16 %v280, %v279
    %v292 = vpack.c.b16 %v282, %v281
    %v293 = vpack.c.b16 %v284, %v283
    %v294 = vpack.c.b16 %v286, %v285
    %303 = vmatprep.subr.bf16.mxu0 0
    %304 = vmatpush1.bf16.msra.mxu0 %v287
    %305 = vmatprep.subr.bf16.mxu0 0
    %306 = vmatpush1.bf16.msra.mxu0 %v288
    %307 = vmatprep.subr.bf16.mxu0 0
    %308 = vmatpush1.bf16.msra.mxu0 %v289
    %309 = vmatprep.subr.bf16.mxu0 0
    %310 = vmatpush1.bf16.msra.mxu0 %v290
    %311 = vmatprep.subr.bf16.mxu0 0
    %312 = vmatpush1.bf16.msra.mxu0 %v291
    %313 = vmatprep.subr.bf16.mxu0 0
    %314 = vmatpush1.bf16.msra.mxu0 %v292
    %315 = vmatprep.subr.bf16.mxu0 0
    %316 = vmatpush1.bf16.msra.mxu0 %v293
    %317 = vmatprep.subr.bf16.mxu0 0
    %318 = vmatpush1.bf16.msra.mxu0 %v294
    %319 = vmatprep.subr.bf16.mxu0 0
    %320 = vmatpush1.bf16.msra.mxu0 0
    %321 = vmatprep.subr.bf16.mxu0 0
    %322 = vmatpush1.bf16.msra.mxu0 0
    %323 = vmatprep.subr.bf16.mxu0 0
    %324 = vmatpush1.bf16.msra.mxu0 0
    %325 = vmatprep.subr.bf16.mxu0 0
    %326 = vmatpush1.bf16.msra.mxu0 0
    %327 = vmatprep.subr.bf16.mxu0 0
    %328 = vmatpush1.bf16.msra.mxu0 0
    %329 = vmatprep.subr.bf16.mxu0 0
    %330 = vmatpush1.bf16.msra.mxu0 0
    %331 = vmatprep.subr.bf16.mxu0 0
    %332 = vmatpush1.bf16.msra.mxu0 0
    %333 = vmatprep.subr.bf16.mxu0 0
    %334 = vmatpush1.bf16.msra.mxu0 0
    %335 = vmatprep.mubr.bf16.mxu0 0
    %336 = vmatmul.mubr.bf16.gmra.mrb[0].mxu0 %v231
    %v337 = vpop.f32.mrb[0].mxu0
    %v338 = vadd.f32 %v253, %v337
    %v339 = vpop.f32.mrb[0].mxu0
    %v340 = vpop.f32.mrb[0].mxu0
    %v341 = vpop.f32.mrb[0].mxu0
    %342 = vdwg.mxu0
    %v343 = vmax.f32 %v338, 0.0
    %v344 = vpack.c.bf16 %v230, %v230
    %v345 = vld [vmem:[#allocation10] sm:$0xf]
    %v346 = vld [vmem:[#allocation10 + $0x4] sm:$0xf]
    %v347 = vld [vmem:[#allocation10 + $0x8] sm:$0xf]
    %v348 = vld [vmem:[#allocation10 + $0xc] sm:$0xf]
    %v349 = vld [vmem:[#allocation10 + $0x10] sm:$0xf]
    %v350 = vld [vmem:[#allocation10 + $0x14] sm:$0xf]
    %v351 = vld [vmem:[#allocation10 + $0x18] sm:$0xf]
    %v352 = vld [vmem:[#allocation10 + $0x1c] sm:$0xf]
    %v353 = vld [vmem:[#allocation10 + $0x20] sm:$0xf]
    %v354 = vld [vmem:[#allocation10 + $0x24] sm:$0xf]
    %v355 = vld [vmem:[#allocation10 + $0x28] sm:$0xf]
    %v356 = vld [vmem:[#allocation10 + $0x2c] sm:$0xf]
    %v357 = vld [vmem:[#allocation10 + $0x30] sm:$0xf]
    %v358 = vld [vmem:[#allocation10 + $0x34] sm:$0xf]
    %v359 = vld [vmem:[#allocation10 + $0x38] sm:$0xf]
    %v360 = vld [vmem:[#allocation10 + $0x3c] sm:$0xf]
    %v361 = vpack.c.bf16 %v343, %v343
    %v362 = vld [vmem:[#allocation11] sm:$0xf]
    %v363 = vld [vmem:[#allocation11 + $0x4] sm:$0xf]
    %v364 = vld [vmem:[#allocation11 + $0x8] sm:$0xf]
    %v365 = vld [vmem:[#allocation11 + $0xc] sm:$0xf]
    %v366 = vld [vmem:[#allocation11 + $0x10] sm:$0xf]
    %v367 = vld [vmem:[#allocation11 + $0x14] sm:$0xf]
    %v368 = vld [vmem:[#allocation11 + $0x18] sm:$0xf]
    %v369 = vld [vmem:[#allocation11 + $0x1c] sm:$0xf]
    %v370 = vld [vmem:[#allocation11 + $0x20] sm:$0xf]
    %v371 = vld [vmem:[#allocation11 + $0x24] sm:$0xf]
    %v372 = vld [vmem:[#allocation11 + $0x28] sm:$0xf]
    %v373 = vld [vmem:[#allocation11 + $0x2c] sm:$0xf]
    %v374 = vld [vmem:[#allocation11 + $0x30] sm:$0xf]
    %v375 = vld [vmem:[#allocation11 + $0x34] sm:$0xf]
    %v376 = vld [vmem:[#allocation11 + $0x38] sm:$0xf]
    %v377 = vld [vmem:[#allocation11 + $0x3c] sm:$0xf]
    %v394 = vunpack.c.l.b16 %v362
    %v395 = vunpack.c.l.b16 %v363
    %v396 = vunpack.c.l.b16 %v364
    %v397 = vunpack.c.l.b16 %v365
    %v398 = vunpack.c.l.b16 %v366
    %v399 = vunpack.c.l.b16 %v367
    %v400 = vunpack.c.l.b16 %v368
    %v401 = vunpack.c.l.b16 %v369
    %v402 = vunpack.c.l.b16 %v370
    %v403 = vunpack.c.l.b16 %v371
    %v404 = vunpack.c.l.b16 %v372
    %v405 = vunpack.c.l.b16 %v373
    %v406 = vunpack.c.l.b16 %v374
    %v407 = vunpack.c.l.b16 %v375
    %v408 = vunpack.c.l.b16 %v376
    %v409 = vunpack.c.l.b16 %v377
    %v410 = vpack.c.b16 %v395, %v394
    %v411 = vpack.c.b16 %v397, %v396
    %v412 = vpack.c.b16 %v399, %v398
    %v413 = vpack.c.b16 %v401, %v400
    %v414 = vpack.c.b16 %v403, %v402
    %v415 = vpack.c.b16 %v405, %v404
    %v416 = vpack.c.b16 %v407, %v406
    %v417 = vpack.c.b16 %v409, %v408
    %426 = vmatprep.subr.bf16.mxu0 0
    %427 = vmatpush1.bf16.msra.mxu0 %v410
    %428 = vmatprep.subr.bf16.mxu0 0
    %429 = vmatpush1.bf16.msra.mxu0 %v411
    %430 = vmatprep.subr.bf16.mxu0 0
    %431 = vmatpush1.bf16.msra.mxu0 %v412
    %432 = vmatprep.subr.bf16.mxu0 0
    %433 = vmatpush1.bf16.msra.mxu0 %v413
    %434 = vmatprep.subr.bf16.mxu0 0
    %435 = vmatpush1.bf16.msra.mxu0 %v414
    %436 = vmatprep.subr.bf16.mxu0 0
    %437 = vmatpush1.bf16.msra.mxu0 %v415
    %438 = vmatprep.subr.bf16.mxu0 0
    %439 = vmatpush1.bf16.msra.mxu0 %v416
    %440 = vmatprep.subr.bf16.mxu0 0
    %441 = vmatpush1.bf16.msra.mxu0 %v417
    %442 = vmatprep.subr.bf16.mxu0 0
    %443 = vmatpush1.bf16.msra.mxu0 0
    %444 = vmatprep.subr.bf16.mxu0 0
    %445 = vmatpush1.bf16.msra.mxu0 0
    %446 = vmatprep.subr.bf16.mxu0 0
    %447 = vmatpush1.bf16.msra.mxu0 0
    %448 = vmatprep.subr.bf16.mxu0 0
    %449 = vmatpush1.bf16.msra.mxu0 0
    %450 = vmatprep.subr.bf16.mxu0 0
    %451 = vmatpush1.bf16.msra.mxu0 0
    %452 = vmatprep.subr.bf16.mxu0 0
    %453 = vmatpush1.bf16.msra.mxu0 0
    %454 = vmatprep.subr.bf16.mxu0 0
    %455 = vmatpush1.bf16.msra.mxu0 0
    %456 = vmatprep.subr.bf16.mxu0 0
    %457 = vmatpush1.bf16.msra.mxu0 0
    %458 = vmatprep.mubr.bf16.mxu0 0
    %459 = vmatmul.mubr.bf16.gmra.mrb[0].mxu0 %v361
    %v460 = vpop.f32.mrb[0].mxu0
    %v461 = vadd.f32 0.0, %v460
    %v462 = vpop.f32.mrb[0].mxu0
    %v463 = vpop.f32.mrb[0].mxu0
    %v464 = vpop.f32.mrb[0].mxu0
    %465 = vdwg.mxu0
    %v482 = vunpack.c.l.b16 %v345
    %v483 = vunpack.c.l.b16 %v346
    %v484 = vunpack.c.l.b16 %v347
    %v485 = vunpack.c.l.b16 %v348
    %v486 = vunpack.c.l.b16 %v349
    %v487 = vunpack.c.l.b16 %v350
    %v488 = vunpack.c.l.b16 %v351
    %v489 = vunpack.c.l.b16 %v352
    %v490 = vunpack.c.l.b16 %v353
    %v491 = vunpack.c.l.b16 %v354
    %v492 = vunpack.c.l.b16 %v355
    %v493 = vunpack.c.l.b16 %v356
    %v494 = vunpack.c.l.b16 %v357
    %v495 = vunpack.c.l.b16 %v358
    %v496 = vunpack.c.l.b16 %v359
    %v497 = vunpack.c.l.b16 %v360
    %v498 = vpack.c.b16 %v483, %v482
    %v499 = vpack.c.b16 %v485, %v484
    %v500 = vpack.c.b16 %v487, %v486
    %v501 = vpack.c.b16 %v489, %v488
    %v502 = vpack.c.b16 %v491, %v490
    %v503 = vpack.c.b16 %v493, %v492
    %v504 = vpack.c.b16 %v495, %v494
    %v505 = vpack.c.b16 %v497, %v496
    %514 = vmatprep.subr.bf16.mxu0 0
    %515 = vmatpush1.bf16.msra.mxu0 %v498
    %516 = vmatprep.subr.bf16.mxu0 0
    %517 = vmatpush1.bf16.msra.mxu0 %v499
    %518 = vmatprep.subr.bf16.mxu0 0
    %519 = vmatpush1.bf16.msra.mxu0 %v500
    %520 = vmatprep.subr.bf16.mxu0 0
    %521 = vmatpush1.bf16.msra.mxu0 %v501
    %522 = vmatprep.subr.bf16.mxu0 0
    %523 = vmatpush1.bf16.msra.mxu0 %v502
    %524 = vmatprep.subr.bf16.mxu0 0
    %525 = vmatpush1.bf16.msra.mxu0 %v503
    %526 = vmatprep.subr.bf16.mxu0 0
    %527 = vmatpush1.bf16.msra.mxu0 %v504
    %528 = vmatprep.subr.bf16.mxu0 0
    %529 = vmatpush1.bf16.msra.mxu0 %v505
    %530 = vmatprep.subr.bf16.mxu0 0
    %531 = vmatpush1.bf16.msra.mxu0 0
    %532 = vmatprep.subr.bf16.mxu0 0
    %533 = vmatpush1.bf16.msra.mxu0 0
    %534 = vmatprep.subr.bf16.mxu0 0
    %535 = vmatpush1.bf16.msra.mxu0 0
    %536 = vmatprep.subr.bf16.mxu0 0
    %537 = vmatpush1.bf16.msra.mxu0 0
    %538 = vmatprep.subr.bf16.mxu0 0
    %539 = vmatpush1.bf16.msra.mxu0 0
    %540 = vmatprep.subr.bf16.mxu0 0
    %541 = vmatpush1.bf16.msra.mxu0 0
    %542 = vmatprep.subr.bf16.mxu0 0
    %543 = vmatpush1.bf16.msra.mxu0 0
    %544 = vmatprep.subr.bf16.mxu0 0
    %545 = vmatpush1.bf16.msra.mxu0 0
    %546 = vmatprep.mubr.bf16.mxu0 0
    %547 = vmatmul.mubr.bf16.gmra.mrb[0].mxu0 %v344
    %v548 = vpop.f32.mrb[0].mxu0
    %v549 = vadd.f32 %v461, %v548
    %v550 = vpop.f32.mrb[0].mxu0
    %v551 = vpop.f32.mrb[0].mxu0
    %v552 = vpop.f32.mrb[0].mxu0
    %553 = vdwg.mxu0
    %v554 = vld [vmem:[%s8] sm:$0x1]
    %v556 = vlaneseq
    %v557 = vshrl.u32 %v556, 7
    %v558 = vsub.s32 0, %v557
    %v559 = vrot.slane %v554, %v558
    %v561 = vadd.f32 %v549, %v559
    %v562 = vmax.f32 %v561, 0.0
    %v563 = vld [vmem:[%s9] sm:$0x1]
    %v565 = vlaneseq
    %v566 = vshrl.u32 %v565, 7
    %v567 = vsub.s32 0, %v566
    %v568 = vrot.slane %v563, %v567
    %v570 = vmul.f32 %v562, %v568
    %571 = vadd.xlane.f32.xlu0 %v570
    %v572 = vpop.xlane.xlu0 %571
    %v573 = vld [vmem:[%s10] sm:$0x1]
    %v575 = vlaneseq
    %v576 = vshrl.u32 %v575, 7
    %v577 = vsub.s32 0, %v576
    %v578 = vrot.slane %v573, %v577
    %v580 = vadd.f32 %v572, %v578
    %581 = vst [vmem:[#allocation13] sm:$0xff] %v580
    // Predicated region
    $region70: #{tpu_custom_call.1} parent=1 // pred_check
      _
    $region71: #{tpu_custom_call.1} parent=1 // pred_check_branch
      %583 = sbr.rel (0) target = $region73
    $region72: #{tpu_custom_call.1} parent=1 // pred_region
      %s585 = ssub.s32 128, 128
      %586 = vsyncadd [#allocation4], %s585
      %s588 = sshll.u32 [#allocation13], 4
      %s589 = int_to_ptr.vmem [resolvable:$true] %s588
      %591 = dma.vmem_to_hbm [thread:$0]  %s589, 128, %s11, [#allocation4]
    $region73: #{tpu_custom_call.1} parent=1 // pred_fallthru
      _
    // Predicated region
    $region74: #{tpu_custom_call.1} parent=1 // pred_check
      _
    $region75: #{tpu_custom_call.1} parent=1 // pred_check_branch
      %593 = sbr.rel (0) target = $region77
    $region76: #{tpu_custom_call.1} parent=1 // pred_region
      %594 = dma.done [#allocation4], 128
    $region77: #{tpu_custom_call.1} parent=1 // pred_fallthru
      _
    %595 = vsyncpa [#allocation3], 1
    %596 = vsyncpa [#allocation6], 1
    %597 = vsyncpa [#allocation9], 1
    %598 = vsyncpa [#allocation12], 1
    %599 = vsyncpa [#allocation4], 1

</llo_original>
